<compile_context>
chip_gen: v5e
topology: v5e:2x2
jax: 0.10.0
libtpu: 0.0.40
codegen_flags: <defaults>
</compile_context>

<pallas_src>
import functools

import jax
import jax.numpy as jnp
from jax.experimental import pallas as pl
from jax.experimental.pallas import tpu as pltpu


# ------------------------------ fused Pallas kernel ------------------------------ #

def _gloss_kernel(params_ref, cond_ref, nbias_ref, loss_ref, *, img_c, cond_c, inv_n):
    # cond: (Cc, L) lane-dense, L = B*H*W lanes; nbias: (img_c, L) per-lane
    # generator bias (g_b + W_noise @ noise, precomputed in the wrapper).
    cond = cond_ref[...]
    L = cond.shape[1]

    # Offsets into the packed scalar-parameter SMEM slab.
    gwc_off = 0                       # img_c*Cc generator weights (cond half), row-major (o, c)
    dwi_off = img_c * cond_c          # img_c  discriminator weights (img half)
    dwc_off = dwi_off + img_c         # Cc     discriminator weights (cond half)
    db_off = dwc_off + cond_c         # 1      discriminator bias

    # ---- discriminator cond-half contribution (VPU scalar-broadcast MAC) ----
    logit = jnp.zeros((1, L), jnp.float32)
    for c in range(cond_c):
        logit = logit + params_ref[dwc_off + c] * cond[c:c + 1, :]

    # ---- generator rows (1x1 conv) -> tanh (EUP) -> discriminator img-half ----
    for o in range(img_c):
        row = nbias_ref[o:o + 1, :]                                   # (1, L)
        for c in range(cond_c):
            row = row + params_ref[gwc_off + o * cond_c + c] * cond[c:c + 1, :]
        fake = jnp.tanh(row)
        logit = logit + params_ref[dwi_off + o] * fake

    logit = logit + params_ref[db_off]

    # ---- BCE(sigmoid(logit), target=1) in logit space ----
    # -log(sigmoid(z)) = softplus(-z); nn.BCELoss clamps log at -100 -> per-elem <= 100.
    sp = jnp.maximum(-logit, 0.0) + jnp.log(1.0 + jnp.exp(-jnp.abs(logit)))
    loss_ref[0, 0] = jnp.sum(jnp.minimum(sp, 100.0)) * inv_n


def gloss_fused(condition, noise, g_w, g_b, d_w, d_b, *, noise_dim, img_c):
    """One grid-less pallas_call: generator -> discriminator -> BCE(., ones) -> scalar."""
    B, Cc, H, W = condition.shape
    HW = H * W
    L = B * HW

    # Lane-dense (Cc, B*HW) condition slab: whole batch in one block / one DMA.
    cond2 = jnp.transpose(condition.reshape(B, Cc, HW), (1, 0, 2)).reshape(Cc, L)
    cond2 = cond2.astype(jnp.float32)

    # Fold noise projection + generator bias into a per-lane bias (tiny XLA dot).
    nb = noise.reshape(B, noise_dim) @ g_w[:noise_dim, :] + g_b            # (B, img_c)
    nbias = jnp.broadcast_to(nb.T[:, :, None], (img_c, B, HW)).reshape(img_c, L)
    nbias = nbias.astype(jnp.float32)

    # Pack the remaining tiny weights/bias into ONE flat SMEM slab (20 floats).
    params = jnp.concatenate([
        g_w[noise_dim:, :].T.reshape(-1),    # gwc[o, c] = g_w[nd + c, o], row-major (o, c)
        d_w[:img_c, 0],                      # dwi[o]
        d_w[img_c:, 0],                      # dwc[c]
        d_b.reshape(-1),                     # db
    ]).astype(jnp.float32)

    inv_n = 1.0 / float(B * HW)              # mean over all B*1*H*W discriminator outputs
    kernel = functools.partial(_gloss_kernel, img_c=img_c, cond_c=Cc, inv_n=inv_n)

    out = pl.pallas_call(
        kernel,
        out_shape=jax.ShapeDtypeStruct((1, 1), jnp.float32),
        in_specs=[
            pl.BlockSpec(memory_space=pltpu.MemorySpace.SMEM),   # packed scalar params
            pl.BlockSpec(memory_space=pltpu.MemorySpace.VMEM),   # condition slab (Cc, L)
            pl.BlockSpec(memory_space=pltpu.MemorySpace.VMEM),   # noise+bias slab (img_c, L)
        ],
        out_specs=pl.BlockSpec(memory_space=pltpu.MemorySpace.SMEM),
    )(params, cond2, nbias)
    return out[0, 0]


# ------------------------------ synthetic G/D params ------------------------------ #

def init_params(noise_dim, cond_c, img_c):
    k = jax.random.PRNGKey(42)
    k1, k2, k3, k4 = jax.random.split(k, 4)
    g_w = 0.1 * jax.random.normal(k1, (noise_dim + cond_c, img_c), jnp.float32)
    g_b = 0.1 * jax.random.normal(k2, (1, img_c), jnp.float32)
    d_w = 0.1 * jax.random.normal(k3, (img_c + cond_c, 1), jnp.float32)
    d_b = 0.1 * jax.random.normal(k4, (1, 1), jnp.float32)
    return g_w, g_b, d_w, d_b


# ----------------------------------- GLoss ----------------------------------- #

def g_loss(condition, key, params, *, noise_dim, img_c):
    # torch: rd.normal(0, 1, (B, noise_dim, 1, 1)) -> deterministic JAX normal stand-in
    # TODO(synk): numpy-RNG noise sampling has no in-kernel equivalent; sampled host-side.
    B = condition.shape[0]
    noise = jax.random.normal(key, (B, noise_dim, 1, 1), jnp.float32)
    g_w, g_b, d_w, d_b = params
    return gloss_fused(condition, noise, g_w, g_b, d_w, d_b,
                       noise_dim=noise_dim, img_c=img_c)


# ------------------------------------ main ------------------------------------ #

if __name__ == "__main__":
    B, Cc, H, W = 2, 4, 16, 16
    noise_dim, img_c = 8, 3

    key = jax.random.PRNGKey(0)
    kc, kn = jax.random.split(key)
    condition = jax.random.normal(kc, (B, Cc, H, W), jnp.float32)

    params = init_params(noise_dim, Cc, img_c)
    g_w, g_b, d_w, d_b = params

    loss_fn = jax.jit(functools.partial(g_loss, noise_dim=noise_dim, img_c=img_c))
    loss = loss_fn(condition, kn, params)
    jax.block_until_ready(loss)

    # pure-JAX reference (original concat / sigmoid / log formulation, no Pallas)
    noise = jax.random.normal(kn, (B, noise_dim, 1, 1), jnp.float32)
    nm = jnp.broadcast_to(noise, (B, noise_dim, H, W))
    gx = jnp.transpose(jnp.concatenate([nm, condition], 1), (0, 2, 3, 1)).reshape(-1, noise_dim + Cc)
    fimg = jnp.transpose(jnp.tanh(gx @ g_w + g_b).reshape(B, H, W, img_c), (0, 3, 1, 2))
    dx = jnp.transpose(jnp.concatenate([fimg, condition], 1), (0, 2, 3, 1)).reshape(-1, img_c + Cc)
    pref = jax.nn.sigmoid(dx @ d_w + d_b)
    ref = -jnp.mean(jnp.maximum(jnp.log(pref), -100.0))

    assert jnp.allclose(loss, ref, rtol=1e-4, atol=1e-5), (loss, ref)

    print("KERNEL_OK")
</pallas_src>

<mosaic_0001>
module attributes {stable_mosaic.version = 11 : i64} {
  func.func @_gloss_kernel(%arg0: memref<20xf32, #tpu.memory_space<smem>>, %arg1: memref<4x512xf32, #tpu.memory_space<vmem>>, %arg2: memref<3x512xf32, #tpu.memory_space<vmem>>, %arg3: memref<1x1xf32, #tpu.memory_space<smem>>) attributes {dimension_semantics = [], scalar_prefetch = 0 : i64, scratch_operands = 0 : i64, tpu.core_type = #tpu.core_type<tc>} {
    %c0 = arith.constant 0 : index
    %c0_0 = arith.constant 0 : index
    %0 = vector.load %arg1[%c0, %c0_0] : memref<4x512xf32, #tpu.memory_space<vmem>>, vector<4x512xf32>
    %cst = arith.constant 0.000000e+00 : f32
    %1 = vector.broadcast %cst : f32 to vector<1x512xf32>
    %c15 = arith.constant 15 : index
    %2 = memref.load %arg0[%c15] : memref<20xf32, #tpu.memory_space<smem>>
    %3 = vector.extract_strided_slice %0 {offsets = [0, 0], sizes = [1, 512], strides = [1, 1]} : vector<4x512xf32> to vector<1x512xf32>
    %4 = vector.broadcast %2 : f32 to vector<1x512xf32>
    %5 = arith.mulf %4, %3 : vector<1x512xf32>
    %6 = arith.addf %1, %5 : vector<1x512xf32>
    %c16 = arith.constant 16 : index
    %7 = memref.load %arg0[%c16] : memref<20xf32, #tpu.memory_space<smem>>
    %8 = vector.extract_strided_slice %0 {offsets = [1, 0], sizes = [1, 512], strides = [1, 1]} : vector<4x512xf32> to vector<1x512xf32>
    %9 = vector.broadcast %7 : f32 to vector<1x512xf32>
    %10 = arith.mulf %9, %8 : vector<1x512xf32>
    %11 = arith.addf %6, %10 : vector<1x512xf32>
    %c17 = arith.constant 17 : index
    %12 = memref.load %arg0[%c17] : memref<20xf32, #tpu.memory_space<smem>>
    %13 = vector.extract_strided_slice %0 {offsets = [2, 0], sizes = [1, 512], strides = [1, 1]} : vector<4x512xf32> to vector<1x512xf32>
    %14 = vector.broadcast %12 : f32 to vector<1x512xf32>
    %15 = arith.mulf %14, %13 : vector<1x512xf32>
    %16 = arith.addf %11, %15 : vector<1x512xf32>
    %c18 = arith.constant 18 : index
    %17 = memref.load %arg0[%c18] : memref<20xf32, #tpu.memory_space<smem>>
    %18 = vector.extract_strided_slice %0 {offsets = [3, 0], sizes = [1, 512], strides = [1, 1]} : vector<4x512xf32> to vector<1x512xf32>
    %19 = vector.broadcast %17 : f32 to vector<1x512xf32>
    %20 = arith.mulf %19, %18 : vector<1x512xf32>
    %21 = arith.addf %16, %20 : vector<1x512xf32>
    %c0_1 = arith.constant 0 : index
    %c0_2 = arith.constant 0 : index
    %22 = vector.load %arg2[%c0_1, %c0_2] : memref<3x512xf32, #tpu.memory_space<vmem>>, vector<1x512xf32>
    %c0_3 = arith.constant 0 : index
    %23 = memref.load %arg0[%c0_3] : memref<20xf32, #tpu.memory_space<smem>>
    %24 = vector.extract_strided_slice %0 {offsets = [0, 0], sizes = [1, 512], strides = [1, 1]} : vector<4x512xf32> to vector<1x512xf32>
    %25 = vector.broadcast %23 : f32 to vector<1x512xf32>
    %26 = arith.mulf %25, %24 : vector<1x512xf32>
    %27 = arith.addf %22, %26 : vector<1x512xf32>
    %c1 = arith.constant 1 : index
    %28 = memref.load %arg0[%c1] : memref<20xf32, #tpu.memory_space<smem>>
    %29 = vector.extract_strided_slice %0 {offsets = [1, 0], sizes = [1, 512], strides = [1, 1]} : vector<4x512xf32> to vector<1x512xf32>
    %30 = vector.broadcast %28 : f32 to vector<1x512xf32>
    %31 = arith.mulf %30, %29 : vector<1x512xf32>
    %32 = arith.addf %27, %31 : vector<1x512xf32>
    %c2 = arith.constant 2 : index
    %33 = memref.load %arg0[%c2] : memref<20xf32, #tpu.memory_space<smem>>
    %34 = vector.extract_strided_slice %0 {offsets = [2, 0], sizes = [1, 512], strides = [1, 1]} : vector<4x512xf32> to vector<1x512xf32>
    %35 = vector.broadcast %33 : f32 to vector<1x512xf32>
    %36 = arith.mulf %35, %34 : vector<1x512xf32>
    %37 = arith.addf %32, %36 : vector<1x512xf32>
    %c3 = arith.constant 3 : index
    %38 = memref.load %arg0[%c3] : memref<20xf32, #tpu.memory_space<smem>>
    %39 = vector.extract_strided_slice %0 {offsets = [3, 0], sizes = [1, 512], strides = [1, 1]} : vector<4x512xf32> to vector<1x512xf32>
    %40 = vector.broadcast %38 : f32 to vector<1x512xf32>
    %41 = arith.mulf %40, %39 : vector<1x512xf32>
    %42 = arith.addf %37, %41 : vector<1x512xf32>
    %43 = math.tanh %42 : vector<1x512xf32>
    %c12 = arith.constant 12 : index
    %44 = memref.load %arg0[%c12] : memref<20xf32, #tpu.memory_space<smem>>
    %45 = vector.broadcast %44 : f32 to vector<1x512xf32>
    %46 = arith.mulf %45, %43 : vector<1x512xf32>
    %47 = arith.addf %21, %46 : vector<1x512xf32>
    %c1_4 = arith.constant 1 : index
    %c0_5 = arith.constant 0 : index
    %48 = vector.load %arg2[%c1_4, %c0_5] : memref<3x512xf32, #tpu.memory_space<vmem>>, vector<1x512xf32>
    %c4 = arith.constant 4 : index
    %49 = memref.load %arg0[%c4] : memref<20xf32, #tpu.memory_space<smem>>
    %50 = vector.extract_strided_slice %0 {offsets = [0, 0], sizes = [1, 512], strides = [1, 1]} : vector<4x512xf32> to vector<1x512xf32>
    %51 = vector.broadcast %49 : f32 to vector<1x512xf32>
    %52 = arith.mulf %51, %50 : vector<1x512xf32>
    %53 = arith.addf %48, %52 : vector<1x512xf32>
    %c5 = arith.constant 5 : index
    %54 = memref.load %arg0[%c5] : memref<20xf32, #tpu.memory_space<smem>>
    %55 = vector.extract_strided_slice %0 {offsets = [1, 0], sizes = [1, 512], strides = [1, 1]} : vector<4x512xf32> to vector<1x512xf32>
    %56 = vector.broadcast %54 : f32 to vector<1x512xf32>
    %57 = arith.mulf %56, %55 : vector<1x512xf32>
    %58 = arith.addf %53, %57 : vector<1x512xf32>
    %c6 = arith.constant 6 : index
    %59 = memref.load %arg0[%c6] : memref<20xf32, #tpu.memory_space<smem>>
    %60 = vector.extract_strided_slice %0 {offsets = [2, 0], sizes = [1, 512], strides = [1, 1]} : vector<4x512xf32> to vector<1x512xf32>
    %61 = vector.broadcast %59 : f32 to vector<1x512xf32>
    %62 = arith.mulf %61, %60 : vector<1x512xf32>
    %63 = arith.addf %58, %62 : vector<1x512xf32>
    %c7 = arith.constant 7 : index
    %64 = memref.load %arg0[%c7] : memref<20xf32, #tpu.memory_space<smem>>
    %65 = vector.extract_strided_slice %0 {offsets = [3, 0], sizes = [1, 512], strides = [1, 1]} : vector<4x512xf32> to vector<1x512xf32>
    %66 = vector.broadcast %64 : f32 to vector<1x512xf32>
    %67 = arith.mulf %66, %65 : vector<1x512xf32>
    %68 = arith.addf %63, %67 : vector<1x512xf32>
    %69 = math.tanh %68 : vector<1x512xf32>
    %c13 = arith.constant 13 : index
    %70 = memref.load %arg0[%c13] : memref<20xf32, #tpu.memory_space<smem>>
    %71 = vector.broadcast %70 : f32 to vector<1x512xf32>
    %72 = arith.mulf %71, %69 : vector<1x512xf32>
    %73 = arith.addf %47, %72 : vector<1x512xf32>
    %c2_6 = arith.constant 2 : index
    %c0_7 = arith.constant 0 : index
    %74 = vector.load %arg2[%c2_6, %c0_7] : memref<3x512xf32, #tpu.memory_space<vmem>>, vector<1x512xf32>
    %c8 = arith.constant 8 : index
    %75 = memref.load %arg0[%c8] : memref<20xf32, #tpu.memory_space<smem>>
    %76 = vector.extract_strided_slice %0 {offsets = [0, 0], sizes = [1, 512], strides = [1, 1]} : vector<4x512xf32> to vector<1x512xf32>
    %77 = vector.broadcast %75 : f32 to vector<1x512xf32>
    %78 = arith.mulf %77, %76 : vector<1x512xf32>
    %79 = arith.addf %74, %78 : vector<1x512xf32>
    %c9 = arith.constant 9 : index
    %80 = memref.load %arg0[%c9] : memref<20xf32, #tpu.memory_space<smem>>
    %81 = vector.extract_strided_slice %0 {offsets = [1, 0], sizes = [1, 512], strides = [1, 1]} : vector<4x512xf32> to vector<1x512xf32>
    %82 = vector.broadcast %80 : f32 to vector<1x512xf32>
    %83 = arith.mulf %82, %81 : vector<1x512xf32>
    %84 = arith.addf %79, %83 : vector<1x512xf32>
    %c10 = arith.constant 10 : index
    %85 = memref.load %arg0[%c10] : memref<20xf32, #tpu.memory_space<smem>>
    %86 = vector.extract_strided_slice %0 {offsets = [2, 0], sizes = [1, 512], strides = [1, 1]} : vector<4x512xf32> to vector<1x512xf32>
    %87 = vector.broadcast %85 : f32 to vector<1x512xf32>
    %88 = arith.mulf %87, %86 : vector<1x512xf32>
    %89 = arith.addf %84, %88 : vector<1x512xf32>
    %c11 = arith.constant 11 : index
    %90 = memref.load %arg0[%c11] : memref<20xf32, #tpu.memory_space<smem>>
    %91 = vector.extract_strided_slice %0 {offsets = [3, 0], sizes = [1, 512], strides = [1, 1]} : vector<4x512xf32> to vector<1x512xf32>
    %92 = vector.broadcast %90 : f32 to vector<1x512xf32>
    %93 = arith.mulf %92, %91 : vector<1x512xf32>
    %94 = arith.addf %89, %93 : vector<1x512xf32>
    %95 = math.tanh %94 : vector<1x512xf32>
    %c14 = arith.constant 14 : index
    %96 = memref.load %arg0[%c14] : memref<20xf32, #tpu.memory_space<smem>>
    %97 = vector.broadcast %96 : f32 to vector<1x512xf32>
    %98 = arith.mulf %97, %95 : vector<1x512xf32>
    %99 = arith.addf %73, %98 : vector<1x512xf32>
    %c19 = arith.constant 19 : index
    %100 = memref.load %arg0[%c19] : memref<20xf32, #tpu.memory_space<smem>>
    %101 = vector.broadcast %100 : f32 to vector<1x512xf32>
    %102 = arith.addf %99, %101 : vector<1x512xf32>
    %cst_8 = arith.constant 0.000000e+00 : f32
    %103 = vector.broadcast %cst_8 : f32 to vector<1x512xf32>
    %104 = arith.subf %103, %102 : vector<1x512xf32>
    %cst_9 = arith.constant 0.000000e+00 : f32
    %105 = vector.broadcast %cst_9 : f32 to vector<1x512xf32>
    %106 = arith.maximumf %104, %105 : vector<1x512xf32>
    %107 = math.absf %102 : vector<1x512xf32>
    %cst_10 = arith.constant 0.000000e+00 : f32
    %108 = vector.broadcast %cst_10 : f32 to vector<1x512xf32>
    %109 = arith.subf %108, %107 : vector<1x512xf32>
    %110 = math.exp %109 : vector<1x512xf32>
    %cst_11 = arith.constant 1.000000e+00 : f32
    %111 = vector.broadcast %cst_11 : f32 to vector<1x512xf32>
    %112 = arith.addf %111, %110 : vector<1x512xf32>
    %113 = math.log %112 : vector<1x512xf32>
    %114 = arith.addf %106, %113 : vector<1x512xf32>
    %cst_12 = arith.constant 1.000000e+02 : f32
    %115 = vector.broadcast %cst_12 : f32 to vector<1x512xf32>
    %116 = arith.minimumf %114, %115 : vector<1x512xf32>
    %117 = vector.shape_cast %116 : vector<1x512xf32> to vector<1x1x512xf32>
    %cst_13 = arith.constant dense<0.000000e+00> : vector<1xf32>
    %118 = vector.multi_reduction <add>, %117, %cst_13 [1, 2] : vector<1x1x512xf32> to vector<1xf32>
    %119 = vector.shape_cast %118 : vector<1xf32> to vector<1x1x1xf32>
    %120 = vector.extract %119[0, 0, 0] : f32 from vector<1x1x1xf32>
    %cst_14 = arith.constant 0.001953125 : f32
    %121 = arith.mulf %120, %cst_14 : f32
    %c0_15 = arith.constant 0 : index
    %c0_16 = arith.constant 0 : index
    %122 = memref.load %arg3[%c0_15, %c0_16] : memref<1x1xf32, #tpu.memory_space<smem>>
    memref.store %121, %arg3[%c0_15, %c0_16] : memref<1x1xf32, #tpu.memory_space<smem>>
    return
  }
}

</mosaic_0001>

<llo_original>
// kernel: g_loss.1
$region0: #{g_loss.1}
  #allocation0 [shape = 'u32[]', space=smem, size = 0x4, offset = 0x4, fixed_abs, tag = 'smem constant byte address 0x4 - core index']
  #allocation1 [shape = 'u32[72,128]{1,0:T(1,128)}', space=vmem, size = 0x9000, scoped, tag = 'internal scratch']
  %s0 = inlined_call_operand.vmem [shape: f32[20], index: 0, kind: input, shape index: {}]
  %s1 = inlined_call_operand.vmem [shape: f32[4,512], index: 1, kind: input, shape index: {}]
  %s2 = inlined_call_operand.vmem [shape: f32[3,512], index: 2, kind: input, shape index: {}]
  %s3 = inlined_call_operand.hbm [shape: f32[1,1], index: 3, kind: output, shape index: {}]
  %s4 = sld [smem:[#allocation0]]
  $region26: #{g_loss.1} parent=0
    _
  %s6 = ssub.s32 1, %s4
  %s7 = scalar_select 0, %s6, %s4
  $region1: #{g_loss.1} parent=0
    #allocation2 [shape = 'u8[512]{0}', space=smem, size = 0x200, scoped, tag = 'input window, operand 0, single buffered']
    #allocation3 [shape = 's32[1]{0}', space=sflag, size = 0x4, scoped, tag = 'scoped memory for g_loss.1']
    #allocation4 [shape = 's32[1]{0}', space=sflag, size = 0x4, scoped, tag = 'scoped memory for g_loss.1']
    #allocation5 [shape = 'u8[512]{0}', space=smem, size = 0x200, scoped, tag = 'output window, operand 0, single buffered']
    %8 = vsyncpa [#allocation4], 0
    %9 = vsyncpa [#allocation3], 0
    // Predicated region
    $region2: #{g_loss.1} parent=1 // pred_check
      _
    $region3: #{g_loss.1} parent=1 // pred_check_branch
      %11 = sbr.rel (0) target = $region5
    $region4: #{g_loss.1} parent=1 // pred_region
      %13 = vsyncadd [#allocation4], 0
      %s15 = sshll.u32 %s0, 4
      %s16 = int_to_ptr.vmem [resolvable:$true] %s15
      %18 = dma.vmem_to_smem %s16, 16, [#allocation2], [#allocation4]
    $region5: #{g_loss.1} parent=1 // pred_fallthru
      _
    // Predicated region
    $region6: #{g_loss.1} parent=1 // pred_check
      _
    $region7: #{g_loss.1} parent=1 // pred_check_branch
      %20 = sbr.rel (0) target = $region9
    $region8: #{g_loss.1} parent=1 // pred_region
      _
    $region9: #{g_loss.1} parent=1 // pred_fallthru
      _
    // Predicated region
    $region10: #{g_loss.1} parent=1 // pred_check
      _
    $region11: #{g_loss.1} parent=1 // pred_check_branch
      %22 = sbr.rel (0) target = $region13
    $region12: #{g_loss.1} parent=1 // pred_region
      _
    $region13: #{g_loss.1} parent=1 // pred_fallthru
      _
    // Predicated region
    $region14: #{g_loss.1} parent=1 // pred_check
      _
    $region15: #{g_loss.1} parent=1 // pred_check_branch
      %24 = sbr.rel (0) target = $region17
    $region16: #{g_loss.1} parent=1 // pred_region
      %26 = dma.done [#allocation4], 16
    $region17: #{g_loss.1} parent=1 // pred_fallthru
      _
    %27 = sfence
    %v28 = vld [vmem:[%s1] sm:$0xff]
    %v29 = vld [vmem:[%s1 + $0x8] sm:$0xff]
    %s30 = sld [smem:[#allocation2 + $0xf]]
    %v31 = vstv %s30
    %v32 = vmul.f32 %v31, %v28
    %v33 = vmul.f32 %v31, %v29
    %v34 = vadd.f32 %v32, 0.0
    %v35 = vadd.f32 %v33, 0.0
    %s36 = sld [smem:[#allocation2 + $0x10]]
    %v37 = vstv %s36
    %v38 = vmul.f32 %v37, %v28
    %v39 = vmul.f32 %v37, %v29
    %v42 = vrot.slane %v38, 5
    %v43 = vrot.slane %v42, 4
    %v44 = vrot.slane %v39, 5
    %v45 = vrot.slane %v44, 4
    %v48 = vadd.f32 %v34, %v43
    %v49 = vadd.f32 %v35, %v45
    %s50 = sld [smem:[#allocation2 + $0x11]]
    %v51 = vstv %s50
    %v52 = vmul.f32 %v51, %v28
    %v53 = vmul.f32 %v51, %v29
    %v56 = vrot.slane %v52, 6
    %v57 = vrot.slane %v56, 4
    %v58 = vrot.slane %v53, 6
    %v59 = vrot.slane %v58, 4
    %v62 = vadd.f32 %v48, %v57
    %v63 = vadd.f32 %v49, %v59
    %s64 = sld [smem:[#allocation2 + $0x12]]
    %v65 = vstv %s64
    %v66 = vmul.f32 %v65, %v28
    %v67 = vmul.f32 %v65, %v29
    %v70 = vrot.slane %v66, 7
    %v71 = vrot.slane %v70, 4
    %v72 = vrot.slane %v67, 7
    %v73 = vrot.slane %v72, 4
    %v76 = vadd.f32 %v62, %v71
    %v77 = vadd.f32 %v63, %v73
    %v78 = vld [vmem:[%s2] ss:$4 sm:$0xf]
    %s79 = sld [smem:[#allocation2]]
    %v80 = vstv %s79
    %v81 = vmul.f32 %v80, %v28
    %v82 = vmul.f32 %v80, %v29
    %v85 = vrot.slane %v81, 3
    %v86 = vrot.slane %v82, 6
    %v87 = vrot.slane %v82, 1
    %vm88 = vcmask 1040384
    %v89 = vsel %vm88, %v81, %v85
    %vm90 = vcmask 1042434
    %v91 = vsel %vm90, %v86, %v87
    %vm92 = vcmask 1041408
    %v93 = vsel %vm92, %v89, %v91
    %v95 = vadd.f32 %v78, %v93
    %s96 = sld [smem:[#allocation2 + $0x1]]
    %v97 = vstv %s96
    %v98 = vmul.f32 %v97, %v28
    %v99 = vmul.f32 %v97, %v29
    %102 = vst [vmem:[#allocation1] sm:$0xff] %v98
    %103 = vst [vmem:[#allocation1 + $0x8] sm:$0xff] %v99
    %s104 = scalar_lea.vmem [#allocation1], 1
    %v105 = vld [vmem:[%s104] ss:$4 sm:$0xff]
    %v107 = vadd.f32 %v95, %v105
    %s108 = sld [smem:[#allocation2 + $0x2]]
    %v109 = vstv %s108
    %v110 = vmul.f32 %v109, %v28
    %v111 = vmul.f32 %v109, %v29
    %114 = vst [vmem:[#allocation1] sm:$0xff] %v110
    %115 = vst [vmem:[#allocation1 + $0x8] sm:$0xff] %v111
    %s116 = scalar_lea.vmem [#allocation1], 2
    %v117 = vld [vmem:[%s116] ss:$4 sm:$0xff]
    %v119 = vadd.f32 %v107, %v117
    %s120 = sld [smem:[#allocation2 + $0x3]]
    %v121 = vstv %s120
    %v122 = vmul.f32 %v121, %v28
    %v123 = vmul.f32 %v121, %v29
    %126 = vst [vmem:[#allocation1] sm:$0xff] %v122
    %127 = vst [vmem:[#allocation1 + $0x8] sm:$0xff] %v123
    %s128 = scalar_lea.vmem [#allocation1], 3
    %v129 = vld [vmem:[%s128] ss:$4 sm:$0xff]
    %v131 = vadd.f32 %v119, %v129
    %v132 = vtanh.pop %v131
    %s133 = sld [smem:[#allocation2 + $0xc]]
    %v134 = vstv %s133
    %v135 = vmul.f32 %v134, %v132
    %v138 = vunpack.c.l.s4 286326784
    %v139 = vunpack.c.0.s8 %v138
    %v140 = vperm.slane %v135, %v139
    %v142 = vunpack.c.l.s4 858989090
    %v143 = vunpack.c.0.s8 %v142
    %v144 = vperm.slane %v135, %v143
    %v147 = vadd.f32 %v76, %v140
    %v148 = vadd.f32 %v77, %v144
    %s149 = scalar_lea.vmem %s2, 1
    %v150 = vld [vmem:[%s149] ss:$4 sm:$0xf]
    %s151 = sld [smem:[#allocation2 + $0x4]]
    %v152 = vstv %s151
    %v153 = vmul.f32 %v152, %v28
    %v154 = vmul.f32 %v152, %v29
    %v157 = vrot.slane %v153, 3
    %v158 = vrot.slane %v154, 6
    %v159 = vrot.slane %v154, 1
    %v160 = vsel %vm88, %v153, %v157
    %v161 = vsel %vm90, %v158, %v159
    %v162 = vsel %vm92, %v160, %v161
    %v164 = vadd.f32 %v150, %v162
    %s165 = sld [smem:[#allocation2 + $0x5]]
    %v166 = vstv %s165
    %v167 = vmul.f32 %v166, %v28
    %v168 = vmul.f32 %v166, %v29
    %171 = vst [vmem:[#allocation1] sm:$0xff] %v167
    %172 = vst [vmem:[#allocation1 + $0x8] sm:$0xff] %v168
    %s173 = scalar_lea.vmem [#allocation1], 1
    %v174 = vld [vmem:[%s173] ss:$4 sm:$0xff]
    %v176 = vadd.f32 %v164, %v174
    %s177 = sld [smem:[#allocation2 + $0x6]]
    %v178 = vstv %s177
    %v179 = vmul.f32 %v178, %v28
    %v180 = vmul.f32 %v178, %v29
    %183 = vst [vmem:[#allocation1] sm:$0xff] %v179
    %184 = vst [vmem:[#allocation1 + $0x8] sm:$0xff] %v180
    %s185 = scalar_lea.vmem [#allocation1], 2
    %v186 = vld [vmem:[%s185] ss:$4 sm:$0xff]
    %v188 = vadd.f32 %v176, %v186
    %s189 = sld [smem:[#allocation2 + $0x7]]
    %v190 = vstv %s189
    %v191 = vmul.f32 %v190, %v28
    %v192 = vmul.f32 %v190, %v29
    %195 = vst [vmem:[#allocation1] sm:$0xff] %v191
    %196 = vst [vmem:[#allocation1 + $0x8] sm:$0xff] %v192
    %s197 = scalar_lea.vmem [#allocation1], 3
    %v198 = vld [vmem:[%s197] ss:$4 sm:$0xff]
    %v200 = vadd.f32 %v188, %v198
    %v201 = vtanh.pop %v200
    %s202 = sld [smem:[#allocation2 + $0xd]]
    %v203 = vstv %s202
    %v204 = vmul.f32 %v203, %v201
    %v207 = vunpack.c.l.s4 286326784
    %v208 = vunpack.c.0.s8 %v207
    %v209 = vperm.slane %v204, %v208
    %v211 = vunpack.c.l.s4 858989090
    %v212 = vunpack.c.0.s8 %v211
    %v213 = vperm.slane %v204, %v212
    %v216 = vadd.f32 %v147, %v209
    %v217 = vadd.f32 %v148, %v213
    %s218 = scalar_lea.vmem %s2, 2
    %v219 = vld [vmem:[%s218] ss:$4 sm:$0xf]
    %s220 = sld [smem:[#allocation2 + $0x8]]
    %v221 = vstv %s220
    %v222 = vmul.f32 %v221, %v28
    %v223 = vmul.f32 %v221, %v29
    %v226 = vrot.slane %v222, 3
    %v227 = vrot.slane %v223, 6
    %v228 = vrot.slane %v223, 1
    %v229 = vsel %vm88, %v222, %v226
    %v230 = vsel %vm90, %v227, %v228
    %v231 = vsel %vm92, %v229, %v230
    %v233 = vadd.f32 %v219, %v231
    %s234 = sld [smem:[#allocation2 + $0x9]]
    %v235 = vstv %s234
    %v236 = vmul.f32 %v235, %v28
    %v237 = vmul.f32 %v235, %v29
    %240 = vst [vmem:[#allocation1] sm:$0xff] %v236
    %241 = vst [vmem:[#allocation1 + $0x8] sm:$0xff] %v237
    %s242 = scalar_lea.vmem [#allocation1], 1
    %v243 = vld [vmem:[%s242] ss:$4 sm:$0xff]
    %v245 = vadd.f32 %v233, %v243
    %s246 = sld [smem:[#allocation2 + $0xa]]
    %v247 = vstv %s246
    %v248 = vmul.f32 %v247, %v28
    %v249 = vmul.f32 %v247, %v29
    %252 = vst [vmem:[#allocation1] sm:$0xff] %v248
    %253 = vst [vmem:[#allocation1 + $0x8] sm:$0xff] %v249
    %s254 = scalar_lea.vmem [#allocation1], 2
    %v255 = vld [vmem:[%s254] ss:$4 sm:$0xff]
    %v257 = vadd.f32 %v245, %v255
    %s258 = sld [smem:[#allocation2 + $0xb]]
    %v259 = vstv %s258
    %v260 = vmul.f32 %v259, %v28
    %v261 = vmul.f32 %v259, %v29
    %264 = vst [vmem:[#allocation1] sm:$0xff] %v260
    %265 = vst [vmem:[#allocation1 + $0x8] sm:$0xff] %v261
    %s266 = scalar_lea.vmem [#allocation1], 3
    %v267 = vld [vmem:[%s266] ss:$4 sm:$0xff]
    %v269 = vadd.f32 %v257, %v267
    %v270 = vtanh.pop %v269
    %s271 = sld [smem:[#allocation2 + $0xe]]
    %v272 = vstv %s271
    %v273 = vmul.f32 %v272, %v270
    %v276 = vunpack.c.l.s4 286326784
    %v277 = vunpack.c.0.s8 %v276
    %v278 = vperm.slane %v273, %v277
    %v280 = vunpack.c.l.s4 858989090
    %v281 = vunpack.c.0.s8 %v280
    %v282 = vperm.slane %v273, %v281
    %v285 = vadd.f32 %v216, %v278
    %v286 = vadd.f32 %v217, %v282
    %s287 = sld [smem:[#allocation2 + $0x13]]
    %v288 = vstv %s287
    %v289 = vadd.f32 %v285, %v288
    %v290 = vadd.f32 %v286, %v288
    %v291 = vsub.f32 0.0, %v289
    %v292 = vsub.f32 0.0, %v290
    %v293 = vmax.f32 %v291, 0.0
    %v294 = vmax.f32 %v292, 0.0
    %v295 = vand.u32 2147483647, %v289
    %v296 = vand.u32 2147483647, %v290
    %v297 = vsub.f32 0.0, %v295
    %v298 = vsub.f32 0.0, %v296
    %v299 = vmul.f32 %v297, 1.442695
    %v300 = vpow.pop %v299
    %v301 = vmul.f32 %v298, 1.442695
    %v302 = vpow.pop %v301
    %v303 = vadd.f32 %v300, 1.0
    %v304 = vadd.f32 %v302, 1.0
    %v305 = vlog2.pop %v303
    %v306 = vmul.f32 %v305, 0.6931472
    %v307 = vlog2.pop %v304
    %v308 = vmul.f32 %v307, 0.6931472
    %v309 = vadd.f32 %v293, %v306
    %v310 = vadd.f32 %v294, %v308
    %v311 = vmin.f32 %v309, 100.0
    %v312 = vmin.f32 %v310, 100.0
    %v315 = vperm.slane %v311, 0
    %v316 = vperm.slane %v311, 4
    %v317 = vperm.slane %v312, 0
    %v318 = vperm.slane %v312, 4
    %v323 = vsel %vm88, %v315, 0.0
    %v324 = vsel %vm88, %v316, 0.0
    %v325 = vadd.f32 %v323, %v324
    %v326 = vsel %vm88, %v317, 0.0
    %v327 = vadd.f32 %v325, %v326
    %v328 = vsel %vm88, %v318, 0.0
    %v329 = vadd.f32 %v327, %v328
    %330 = vadd.xlane.f32.xlu0 %v329
    %v331 = vpop.xlane.xlu0 %330
    %v332 = vrot.slane %v331, 4
    %v333 = vadd.f32 %v331, %v332
    %v334 = vrot.slane %v333, 2
    %v335 = vadd.f32 %v333, %v334
    %v336 = vrot.slane %v335, 1
    %v337 = vadd.f32 %v335, %v336
    %s338 = vtos %v337
    %s339 = smul.f32 %s338, 0.001953125
    %s340 = scalar_lea.smem [#allocation5], 0
    %341 = sst [smem:[%s340]] %s339
    // Predicated region
    $region18: #{g_loss.1} parent=1 // pred_check
      _
    $region19: #{g_loss.1} parent=1 // pred_check_branch
      %343 = sbr.rel (0) target = $region21
    $region20: #{g_loss.1} parent=1 // pred_region
      %345 = vsyncadd [#allocation3], 0
      %s347 = sshll.u32 %s3, 4
      %s348 = int_to_ptr.hbm [resolvable:$true] %s347
      %350 = dma.smem_to_hbm [#allocation5], 16, %s348, [#allocation3]
    $region21: #{g_loss.1} parent=1 // pred_fallthru
      _
    // Predicated region
    $region22: #{g_loss.1} parent=1 // pred_check
      _
    $region23: #{g_loss.1} parent=1 // pred_check_branch
      %352 = sbr.rel (0) target = $region25
    $region24: #{g_loss.1} parent=1 // pred_region
      %354 = dma.done [#allocation3], 16
    $region25: #{g_loss.1} parent=1 // pred_fallthru
      _
    %355 = sfence
    %356 = vsyncpa [#allocation3], 1
    %357 = vsyncpa [#allocation4], 1

</llo_original>
